<compile_context>
chip_gen: v7x
topology: tpu7x:2x2x1
jax: 0.10.0
libtpu: 0.0.40
codegen_flags: <defaults>
</compile_context>

<pallas_src>
import numpy as np
import jax
import jax.numpy as jnp
from jax import lax
from jax.experimental import pallas as pl
from jax.experimental.pallas import tpu as pltpu


def _make_find_kernel(N, G, S):
    """Kernel factory; N/G/S are compile-time constants used to build lane patterns."""
    NGS = N * G * S
    GS = G * S

    def find_kernel(c_ref, feat_ref, stack_ref, ptr_ref, wmap_ref, slab_ref,
                    stack_out_ref, ptr_out_ref):
        # Blocks (whole batch, single grid step):
        #   c:(B,H)  feat:(B,N,V)  stack:(B,NGS)  ptr:(B,S)
        #   wmap:(H,V)  slab:(1+G,V) = [b_map ; w_conv^T]
        B = c_ref.shape[0]

        # ---------------- map_c (Dropout = identity at inference): one MXU pass ----------------
        slab = slab_ref[...]                                              # (1+G, V)
        query = jnp.dot(c_ref[...], wmap_ref[...],
                        preferred_element_type=jnp.float32) + slab[0:1, :]  # (B, V)

        # ---------------- Fusion: -(x - y)^2 + relu(x + y) ----------------
        feat = feat_ref[...]                                              # (B, N, V)
        q = query[:, None, :]                                             # (B, 1, V)
        x = -(feat - q) ** 2 + jnp.maximum(feat + q, 0.0)                 # (B, N, V)

        # ---------------- compile-time lane-index patterns (no constant inputs) ----------------
        # Flat lane l = n*G*S + g*S + s  (contiguous reshape of the native (N,G,S) order).
        row_n = lax.broadcasted_iota(jnp.int32, (N, NGS), 0)              # object index n
        lane = lax.broadcasted_iota(jnp.int32, (N, NGS), 1)               # flat lane l
        lane1 = lax.broadcasted_iota(jnp.int32, (1, NGS), 1)
        if S & (S - 1) == 0:
            s_of_l = lane1 & (S - 1)                                      # l mod S (power of 2)
        else:
            s_of_l = lane1 % S

        # ---------------- x_conv + softmax over objects (G tiny -> VPU, not MXU) --------------
        # att is expanded straight into the (B, NGS) flat lane-dense layout via exact
        # 0/1 masks + sublane reduction (no MXU rounding, no lane<->sublane ping-pong:
        # the object axis stays on sublanes throughout).
        att_flat = jnp.zeros((B, NGS), jnp.float32)
        for g in range(G):                                                # G is tiny & static
            w_g = slab[1 + g:2 + g, :]                                    # (1, V)
            logits = jnp.sum(x * w_g[:, None, :], axis=-1, keepdims=True)  # (B, N, 1)
            m = jnp.max(logits, axis=1, keepdims=True)                    # (B, 1, 1)
            e = jnp.exp(logits - m)                                       # (B, N, 1)
            inv = pl.reciprocal(jnp.sum(e, axis=1, keepdims=True), approx=False)
            att_g = e * inv                                               # softmax over objects
            base = row_n * GS + g * S                                     # lanes owned by (n, g)
            scat_g = ((lane >= base) & (lane < base + S)).astype(jnp.float32)  # (N, NGS)
            att_flat = att_flat + jnp.sum(att_g * scat_g[None, :, :], axis=1)  # (B, NGS)

        # ---------------- _move_ptr_fw, directly in the flat layout ----------------
        # new_ptr[s] = ptr[s-1] (s>0), plus top-of-stack mask:  m_fw[i, s] = (s == min(i+1, S-1))
        ptr = ptr_ref[...]                                                # (B, S)
        pfw_flat = jnp.zeros((B, NGS), jnp.float32)
        for i in range(S):                                                # S tiny & static
            tgt = min(i + 1, S - 1)
            mask_i = (s_of_l == tgt).astype(jnp.float32)                  # (1, NGS)
            pfw_flat = pfw_flat + ptr[:, i:i + 1] * mask_i                # VPU broadcast-MAC

        # ---------------- _write_to_stack: one unmasked 128-lane-wide store ----------------
        stack_out_ref[...] = att_flat * pfw_flat + stack_ref[...] * (1.0 - pfw_flat)
        # For l < S we have n(l)=0, g(l)=0, s(l)=l, so the first S lanes are exactly ptr_fw.
        ptr_out_ref[...] = pfw_flat[:, :S]

    return find_kernel


def find_module(vision_feat, feat, feat_edge, c_i, relation_mask,
                att_stack, stack_ptr, mem_in, params):
    """Pallas implementation of FindModule.forward (Dropout = eval-mode identity).
    vision_feat / feat_edge / relation_mask are unused by the reference forward."""
    del vision_feat, feat_edge, relation_mask
    B, N, G, S = att_stack.shape
    H = c_i.shape[-1]
    V = feat.shape[-1]
    NGS = N * G * S

    # Contiguous flatten (pure reshape, no transpose): (B, N, G, S) -> (B, N*G*S).
    stack_flat = jnp.reshape(att_stack, (B, NGS))
    # Pack tiny per-feature params into one slab: row 0 = b_map, rows 1..G = w_conv^T.
    # b_conv is dropped: softmax over the object axis is invariant to a per-glimpse constant.
    slab = jnp.concatenate(
        [jnp.reshape(params["b_map"], (1, V)),
         jnp.reshape(params["w_conv"], (V, G)).T], axis=0)                # (1+G, V)

    kernel = _make_find_kernel(N, G, S)
    stack_out_flat, ptr_out = pl.pallas_call(
        kernel,
        grid=(1,),                                           # whole batch in one step
        in_specs=[
            pl.BlockSpec((B, H), lambda i: (0, 0)),          # c_i
            pl.BlockSpec((B, N, V), lambda i: (0, 0, 0)),    # feat
            pl.BlockSpec((B, NGS), lambda i: (0, 0)),        # att_stack (flat, lane-dense)
            pl.BlockSpec((B, S), lambda i: (0, 0)),          # stack_ptr
            pl.BlockSpec((H, V), lambda i: (0, 0)),          # w_map
            pl.BlockSpec((1 + G, V), lambda i: (0, 0)),      # [b_map ; w_conv^T]
        ],
        out_specs=(
            pl.BlockSpec((B, NGS), lambda i: (0, 0)),
            pl.BlockSpec((B, S), lambda i: (0, 0)),
        ),
        out_shape=(
            jax.ShapeDtypeStruct((B, NGS), jnp.float32),
            jax.ShapeDtypeStruct((B, S), jnp.float32),
        ),
        input_output_aliases={2: 0},                         # stack is read-modify-write
        compiler_params=pltpu.CompilerParams(
            dimension_semantics=("arbitrary",)),
    )(c_i, feat, stack_flat, stack_ptr, params["w_map"], slab)

    att_stack_out = jnp.reshape(stack_out_flat, (B, N, G, S))
    mem_out = jnp.zeros_like(mem_in)                         # mem_in.clone().zero_()
    return att_stack_out, ptr_out, mem_out


def find_module_ref(feat, c_i, att_stack, stack_ptr, mem_in, params):
    """Pure-JAX mirror of the PyTorch FindModule.forward (independent of the kernel's
    flat-layout / iota-mask tricks) for verification."""
    B, N, G, S = att_stack.shape
    query = c_i @ params["w_map"] + params["b_map"]               # (B, V)
    q = query[:, None, :]
    x = -(feat - q) ** 2 + jnp.maximum(feat + q, 0.0)             # (B, N, V)
    logits = x @ params["w_conv"] + params["b_conv"]              # (B, N, G)
    att_out = jax.nn.softmax(logits, axis=1)
    # _move_ptr_fw: conv1d([1,0,0], padding=1) + top mask
    ptr_fw = jnp.concatenate(
        [jnp.zeros_like(stack_ptr[:, :1]), stack_ptr[:, :-1]], axis=1)
    ptr_fw = ptr_fw.at[:, S - 1].add(stack_ptr[:, S - 1])
    # _write_to_stack
    pfw = ptr_fw[:, None, None, :]
    st = att_out[..., None] * pfw + att_stack * (1.0 - pfw)
    return st, ptr_fw, jnp.zeros_like(mem_in)


if __name__ == "__main__":
    # Small shapes consistent with the module
    B, N = 2, 16                 # batch, number of objects
    dim_v, dim_hidden = 32, 32
    glimpses, stack_len = 2, 4   # N * glimpses * stack_len = 128 (full lane width)

    key = jax.random.PRNGKey(0)
    ks = jax.random.split(key, 8)

    feat = jax.random.normal(ks[0], (B, N, dim_v), jnp.float32)
    c_i = jax.random.normal(ks[1], (B, dim_hidden), jnp.float32)
    att_stack = jax.random.uniform(ks[2], (B, N, glimpses, stack_len), jnp.float32)
    stack_ptr = jnp.zeros((B, stack_len), jnp.float32).at[:, 0].set(1.0)
    mem_in = jax.random.normal(ks[3], (B, dim_v), jnp.float32)

    # unused-by-forward inputs (kept for signature fidelity)
    vision_feat = jax.random.normal(ks[4], (B, N, dim_v), jnp.float32)
    feat_edge = jnp.zeros((B, N, N, dim_v), jnp.float32)
    relation_mask = jnp.ones((B, N, N), jnp.float32)

    # Deterministic parameters (map_c: Linear(H->V), x_conv: Linear(V->G))
    params = {
        "w_map": 0.1 * jax.random.normal(ks[5], (dim_hidden, dim_v), jnp.float32),
        "b_map": 0.05 * jnp.ones((1, dim_v), jnp.float32),
        "w_conv": 0.1 * jax.random.normal(ks[6], (dim_v, glimpses), jnp.float32),
        "b_conv": 0.05 * jnp.ones((1, glimpses), jnp.float32),
    }

    find = jax.jit(find_module)
    att_stack_out, ptr_out, mem_out = find(
        vision_feat, feat, feat_edge, c_i, relation_mask,
        att_stack, stack_ptr, mem_in, params)
    jax.block_until_ready((att_stack_out, ptr_out, mem_out))

    # Verify against pure-JAX reference (reference keeps b_conv; softmax invariance
    # makes the kernel's bias drop exact up to float rounding).
    st_ref, ptr_ref_v, mem_ref = find_module_ref(
        feat, c_i, att_stack, stack_ptr, mem_in, params)
    np.testing.assert_allclose(np.asarray(att_stack_out), np.asarray(st_ref),
                               rtol=1e-4, atol=1e-4)
    np.testing.assert_allclose(np.asarray(ptr_out), np.asarray(ptr_ref_v),
                               rtol=1e-4, atol=1e-4)
    np.testing.assert_allclose(np.asarray(mem_out), np.asarray(mem_ref),
                               rtol=0, atol=0)

    print("KERNEL_OK")
</pallas_src>

<mosaic_0001>
module attributes {stable_mosaic.version = 11 : i64} {
  func.func @find_kernel(%arg0: i32, %arg1: memref<2x32xf32, #tpu.memory_space<vmem>>, %arg2: memref<2x16x32xf32, #tpu.memory_space<vmem>>, %arg3: memref<2x128xf32, #tpu.memory_space<vmem>>, %arg4: memref<2x4xf32, #tpu.memory_space<vmem>>, %arg5: memref<32x32xf32, #tpu.memory_space<vmem>>, %arg6: memref<3x32xf32, #tpu.memory_space<vmem>>, %arg7: memref<2x128xf32, #tpu.memory_space<vmem>>, %arg8: memref<2x4xf32, #tpu.memory_space<vmem>>) attributes {dimension_semantics = [#tpu.dimension_semantics<arbitrary>], iteration_bounds = array<i64: 1>, scalar_prefetch = 0 : i64, scratch_operands = 0 : i64, tpu.core_type = #tpu.core_type<tc>, window_params = [{pipeline_mode = #tpu.pipeline_mode<synchronous>, transform_indices = @transform_0, window_bounds = array<i64: 2, 32>}, {pipeline_mode = #tpu.pipeline_mode<synchronous>, transform_indices = @transform_1, window_bounds = array<i64: 2, 16, 32>}, {pipeline_mode = #tpu.pipeline_mode<synchronous>, transform_indices = @transform_2, window_bounds = array<i64: 2, 128>}, {pipeline_mode = #tpu.pipeline_mode<synchronous>, transform_indices = @transform_3, window_bounds = array<i64: 2, 4>}, {pipeline_mode = #tpu.pipeline_mode<synchronous>, transform_indices = @transform_4, window_bounds = array<i64: 32, 32>}, {pipeline_mode = #tpu.pipeline_mode<synchronous>, transform_indices = @transform_5, window_bounds = array<i64: 3, 32>}, {pipeline_mode = #tpu.pipeline_mode<synchronous>, transform_indices = @transform_6, window_bounds = array<i64: 2, 128>}, {pipeline_mode = #tpu.pipeline_mode<synchronous>, transform_indices = @transform_7, window_bounds = array<i64: 2, 4>}]} {
    %c0 = arith.constant 0 : index
    %c0_0 = arith.constant 0 : index
    %0 = vector.load %arg6[%c0, %c0_0] : memref<3x32xf32, #tpu.memory_space<vmem>>, vector<3x32xf32>
    %c0_1 = arith.constant 0 : index
    %c0_2 = arith.constant 0 : index
    %1 = vector.load %arg1[%c0_1, %c0_2] : memref<2x32xf32, #tpu.memory_space<vmem>>, vector<2x32xf32>
    %c0_3 = arith.constant 0 : index
    %c0_4 = arith.constant 0 : index
    %2 = vector.load %arg5[%c0_3, %c0_4] : memref<32x32xf32, #tpu.memory_space<vmem>>, vector<32x32xf32>
    %cst = arith.constant dense<0.000000e+00> : vector<2x32xf32>
    %3 = tpu.matmul %1, %2, %cst {dimension_numbers = #tpu.dot_dimension_numbers<[1], [0], [0], [1], [0, 0, 1, 1], [], []>} : vector<2x32xf32>, vector<32x32xf32>, vector<2x32xf32> -> vector<2x32xf32>
    %4 = vector.extract_strided_slice %0 {offsets = [0, 0], sizes = [1, 32], strides = [1, 1]} : vector<3x32xf32> to vector<1x32xf32>
    %5 = vector.broadcast %4 : vector<1x32xf32> to vector<2x32xf32>
    %6 = arith.addf %3, %5 : vector<2x32xf32>
    %c0_5 = arith.constant 0 : index
    %c0_6 = arith.constant 0 : index
    %c0_7 = arith.constant 0 : index
    %7 = vector.load %arg2[%c0_5, %c0_6, %c0_7] : memref<2x16x32xf32, #tpu.memory_space<vmem>>, vector<2x16x32xf32>
    %8 = vector.shape_cast %6 : vector<2x32xf32> to vector<2x1x32xf32>
    %9 = vector.broadcast %8 : vector<2x1x32xf32> to vector<2x16x32xf32>
    %10 = arith.subf %7, %9 : vector<2x16x32xf32>
    %11 = arith.mulf %10, %10 : vector<2x16x32xf32>
    %cst_8 = arith.constant 0.000000e+00 : f32
    %12 = vector.broadcast %cst_8 : f32 to vector<2x16x32xf32>
    %13 = arith.subf %12, %11 : vector<2x16x32xf32>
    %14 = vector.broadcast %8 : vector<2x1x32xf32> to vector<2x16x32xf32>
    %15 = arith.addf %7, %14 : vector<2x16x32xf32>
    %cst_9 = arith.constant 0.000000e+00 : f32
    %16 = vector.broadcast %cst_9 : f32 to vector<2x16x32xf32>
    %17 = arith.maximumf %15, %16 : vector<2x16x32xf32>
    %18 = arith.addf %13, %17 : vector<2x16x32xf32>
    %19 = tpu.iota {dimensions = array<i32: 0>} : vector<16x128xi32>
    %20 = tpu.iota {dimensions = array<i32: 1>} : vector<16x128xi32>
    %21 = tpu.iota {dimensions = array<i32: 1>} : vector<1x128xi32>
    %c3_i32 = arith.constant 3 : i32
    %22 = vector.broadcast %c3_i32 : i32 to vector<1x128xi32>
    %23 = arith.andi %21, %22 : vector<1x128xi32>
    %cst_10 = arith.constant 0.000000e+00 : f32
    %24 = vector.broadcast %cst_10 : f32 to vector<2x128xf32>
    %25 = vector.extract_strided_slice %0 {offsets = [1, 0], sizes = [1, 32], strides = [1, 1]} : vector<3x32xf32> to vector<1x32xf32>
    %26 = vector.shape_cast %25 : vector<1x32xf32> to vector<1x1x32xf32>
    %27 = vector.broadcast %26 : vector<1x1x32xf32> to vector<2x16x32xf32>
    %28 = arith.mulf %18, %27 : vector<2x16x32xf32>
    %cst_11 = arith.constant dense<0.000000e+00> : vector<2x16xf32>
    %29 = vector.multi_reduction <add>, %28, %cst_11 [2] : vector<2x16x32xf32> to vector<2x16xf32>
    %30 = vector.shape_cast %29 : vector<2x16xf32> to vector<2x16x1xf32>
    %cst_12 = arith.constant dense<0xFF800000> : vector<2x1xf32>
    %31 = vector.multi_reduction <maximumf>, %30, %cst_12 [1] : vector<2x16x1xf32> to vector<2x1xf32>
    %32 = vector.shape_cast %31 : vector<2x1xf32> to vector<2x1x1xf32>
    %33 = vector.broadcast %32 : vector<2x1x1xf32> to vector<2x16x1xf32>
    %34 = arith.subf %30, %33 : vector<2x16x1xf32>
    %35 = math.exp %34 : vector<2x16x1xf32>
    %cst_13 = arith.constant dense<0.000000e+00> : vector<2x1xf32>
    %36 = vector.multi_reduction <add>, %35, %cst_13 [1] : vector<2x16x1xf32> to vector<2x1xf32>
    %37 = vector.shape_cast %36 : vector<2x1xf32> to vector<2x1x1xf32>
    %38 = tpu.reciprocal %37 : vector<2x1x1xf32> -> vector<2x1x1xf32>
    %39 = vector.broadcast %38 : vector<2x1x1xf32> to vector<2x16x1xf32>
    %40 = arith.mulf %35, %39 : vector<2x16x1xf32>
    %c8_i32 = arith.constant 8 : i32
    %41 = vector.broadcast %c8_i32 : i32 to vector<16x128xi32>
    %42 = arith.muli %19, %41 : vector<16x128xi32>
    %c0_i32 = arith.constant 0 : i32
    %43 = vector.broadcast %c0_i32 : i32 to vector<16x128xi32>
    %44 = arith.addi %42, %43 : vector<16x128xi32>
    %45 = arith.cmpi sge, %20, %44 : vector<16x128xi32>
    %c4_i32 = arith.constant 4 : i32
    %46 = vector.broadcast %c4_i32 : i32 to vector<16x128xi32>
    %47 = arith.addi %44, %46 : vector<16x128xi32>
    %48 = arith.cmpi slt, %20, %47 : vector<16x128xi32>
    %49 = arith.andi %45, %48 : vector<16x128xi1>
    %50 = arith.extui %49 : vector<16x128xi1> to vector<16x128xi32>
    %51 = arith.sitofp %50 : vector<16x128xi32> to vector<16x128xf32>
    %52 = vector.shape_cast %51 : vector<16x128xf32> to vector<1x16x128xf32>
    %53 = vector.broadcast %40 : vector<2x16x1xf32> to vector<2x16x128xf32>
    %54 = vector.broadcast %52 : vector<1x16x128xf32> to vector<2x16x128xf32>
    %55 = arith.mulf %53, %54 : vector<2x16x128xf32>
    %cst_14 = arith.constant dense<0.000000e+00> : vector<2x128xf32>
    %56 = vector.multi_reduction <add>, %55, %cst_14 [1] : vector<2x16x128xf32> to vector<2x128xf32>
    %57 = arith.addf %24, %56 : vector<2x128xf32>
    %58 = vector.extract_strided_slice %0 {offsets = [2, 0], sizes = [1, 32], strides = [1, 1]} : vector<3x32xf32> to vector<1x32xf32>
    %59 = vector.shape_cast %58 : vector<1x32xf32> to vector<1x1x32xf32>
    %60 = vector.broadcast %59 : vector<1x1x32xf32> to vector<2x16x32xf32>
    %61 = arith.mulf %18, %60 : vector<2x16x32xf32>
    %cst_15 = arith.constant dense<0.000000e+00> : vector<2x16xf32>
    %62 = vector.multi_reduction <add>, %61, %cst_15 [2] : vector<2x16x32xf32> to vector<2x16xf32>
    %63 = vector.shape_cast %62 : vector<2x16xf32> to vector<2x16x1xf32>
    %cst_16 = arith.constant dense<0xFF800000> : vector<2x1xf32>
    %64 = vector.multi_reduction <maximumf>, %63, %cst_16 [1] : vector<2x16x1xf32> to vector<2x1xf32>
    %65 = vector.shape_cast %64 : vector<2x1xf32> to vector<2x1x1xf32>
    %66 = vector.broadcast %65 : vector<2x1x1xf32> to vector<2x16x1xf32>
    %67 = arith.subf %63, %66 : vector<2x16x1xf32>
    %68 = math.exp %67 : vector<2x16x1xf32>
    %cst_17 = arith.constant dense<0.000000e+00> : vector<2x1xf32>
    %69 = vector.multi_reduction <add>, %68, %cst_17 [1] : vector<2x16x1xf32> to vector<2x1xf32>
    %70 = vector.shape_cast %69 : vector<2x1xf32> to vector<2x1x1xf32>
    %71 = tpu.reciprocal %70 : vector<2x1x1xf32> -> vector<2x1x1xf32>
    %72 = vector.broadcast %71 : vector<2x1x1xf32> to vector<2x16x1xf32>
    %73 = arith.mulf %68, %72 : vector<2x16x1xf32>
    %c8_i32_18 = arith.constant 8 : i32
    %74 = vector.broadcast %c8_i32_18 : i32 to vector<16x128xi32>
    %75 = arith.muli %19, %74 : vector<16x128xi32>
    %c4_i32_19 = arith.constant 4 : i32
    %76 = vector.broadcast %c4_i32_19 : i32 to vector<16x128xi32>
    %77 = arith.addi %75, %76 : vector<16x128xi32>
    %78 = arith.cmpi sge, %20, %77 : vector<16x128xi32>
    %c4_i32_20 = arith.constant 4 : i32
    %79 = vector.broadcast %c4_i32_20 : i32 to vector<16x128xi32>
    %80 = arith.addi %77, %79 : vector<16x128xi32>
    %81 = arith.cmpi slt, %20, %80 : vector<16x128xi32>
    %82 = arith.andi %78, %81 : vector<16x128xi1>
    %83 = arith.extui %82 : vector<16x128xi1> to vector<16x128xi32>
    %84 = arith.sitofp %83 : vector<16x128xi32> to vector<16x128xf32>
    %85 = vector.shape_cast %84 : vector<16x128xf32> to vector<1x16x128xf32>
    %86 = vector.broadcast %73 : vector<2x16x1xf32> to vector<2x16x128xf32>
    %87 = vector.broadcast %85 : vector<1x16x128xf32> to vector<2x16x128xf32>
    %88 = arith.mulf %86, %87 : vector<2x16x128xf32>
    %cst_21 = arith.constant dense<0.000000e+00> : vector<2x128xf32>
    %89 = vector.multi_reduction <add>, %88, %cst_21 [1] : vector<2x16x128xf32> to vector<2x128xf32>
    %90 = arith.addf %57, %89 : vector<2x128xf32>
    %c0_22 = arith.constant 0 : index
    %c0_23 = arith.constant 0 : index
    %91 = vector.load %arg4[%c0_22, %c0_23] : memref<2x4xf32, #tpu.memory_space<vmem>>, vector<2x4xf32>
    %cst_24 = arith.constant 0.000000e+00 : f32
    %92 = vector.broadcast %cst_24 : f32 to vector<2x128xf32>
    %c1_i32 = arith.constant 1 : i32
    %93 = vector.broadcast %c1_i32 : i32 to vector<1x128xi32>
    %94 = arith.cmpi eq, %23, %93 : vector<1x128xi32>
    %95 = arith.extui %94 : vector<1x128xi1> to vector<1x128xi32>
    %96 = arith.sitofp %95 : vector<1x128xi32> to vector<1x128xf32>
    %97 = vector.extract_strided_slice %91 {offsets = [0, 0], sizes = [2, 1], strides = [1, 1]} : vector<2x4xf32> to vector<2x1xf32>
    %98 = vector.broadcast %97 : vector<2x1xf32> to vector<2x128xf32>
    %99 = vector.broadcast %96 : vector<1x128xf32> to vector<2x128xf32>
    %100 = arith.mulf %98, %99 : vector<2x128xf32>
    %101 = arith.addf %92, %100 : vector<2x128xf32>
    %c2_i32 = arith.constant 2 : i32
    %102 = vector.broadcast %c2_i32 : i32 to vector<1x128xi32>
    %103 = arith.cmpi eq, %23, %102 : vector<1x128xi32>
    %104 = arith.extui %103 : vector<1x128xi1> to vector<1x128xi32>
    %105 = arith.sitofp %104 : vector<1x128xi32> to vector<1x128xf32>
    %106 = vector.extract_strided_slice %91 {offsets = [0, 1], sizes = [2, 1], strides = [1, 1]} : vector<2x4xf32> to vector<2x1xf32>
    %107 = vector.broadcast %106 : vector<2x1xf32> to vector<2x128xf32>
    %108 = vector.broadcast %105 : vector<1x128xf32> to vector<2x128xf32>
    %109 = arith.mulf %107, %108 : vector<2x128xf32>
    %110 = arith.addf %101, %109 : vector<2x128xf32>
    %c3_i32_25 = arith.constant 3 : i32
    %111 = vector.broadcast %c3_i32_25 : i32 to vector<1x128xi32>
    %112 = arith.cmpi eq, %23, %111 : vector<1x128xi32>
    %113 = arith.extui %112 : vector<1x128xi1> to vector<1x128xi32>
    %114 = arith.sitofp %113 : vector<1x128xi32> to vector<1x128xf32>
    %115 = vector.extract_strided_slice %91 {offsets = [0, 2], sizes = [2, 1], strides = [1, 1]} : vector<2x4xf32> to vector<2x1xf32>
    %116 = vector.broadcast %115 : vector<2x1xf32> to vector<2x128xf32>
    %117 = vector.broadcast %114 : vector<1x128xf32> to vector<2x128xf32>
    %118 = arith.mulf %116, %117 : vector<2x128xf32>
    %119 = arith.addf %110, %118 : vector<2x128xf32>
    %c3_i32_26 = arith.constant 3 : i32
    %120 = vector.broadcast %c3_i32_26 : i32 to vector<1x128xi32>
    %121 = arith.cmpi eq, %23, %120 : vector<1x128xi32>
    %122 = arith.extui %121 : vector<1x128xi1> to vector<1x128xi32>
    %123 = arith.sitofp %122 : vector<1x128xi32> to vector<1x128xf32>
    %124 = vector.extract_strided_slice %91 {offsets = [0, 3], sizes = [2, 1], strides = [1, 1]} : vector<2x4xf32> to vector<2x1xf32>
    %125 = vector.broadcast %124 : vector<2x1xf32> to vector<2x128xf32>
    %126 = vector.broadcast %123 : vector<1x128xf32> to vector<2x128xf32>
    %127 = arith.mulf %125, %126 : vector<2x128xf32>
    %128 = arith.addf %119, %127 : vector<2x128xf32>
    %129 = arith.mulf %90, %128 : vector<2x128xf32>
    %c0_27 = arith.constant 0 : index
    %c0_28 = arith.constant 0 : index
    %130 = vector.load %arg3[%c0_27, %c0_28] : memref<2x128xf32, #tpu.memory_space<vmem>>, vector<2x128xf32>
    %cst_29 = arith.constant 1.000000e+00 : f32
    %131 = vector.broadcast %cst_29 : f32 to vector<2x128xf32>
    %132 = arith.subf %131, %128 : vector<2x128xf32>
    %133 = arith.mulf %130, %132 : vector<2x128xf32>
    %134 = arith.addf %129, %133 : vector<2x128xf32>
    %c0_30 = arith.constant 0 : index
    %c0_31 = arith.constant 0 : index
    %135 = vector.load %arg7[%c0_30, %c0_31] : memref<2x128xf32, #tpu.memory_space<vmem>>, vector<2x128xf32>
    tpu.vector_store %arg7[%c0_30, %c0_31], %134 {strides = array<i32>} : memref<2x128xf32, #tpu.memory_space<vmem>>, vector<2x128xf32>,
    %136 = vector.extract_strided_slice %128 {offsets = [0, 0], sizes = [2, 4], strides = [1, 1]} : vector<2x128xf32> to vector<2x4xf32>
    %c0_32 = arith.constant 0 : index
    %c0_33 = arith.constant 0 : index
    %137 = vector.load %arg8[%c0_32, %c0_33] : memref<2x4xf32, #tpu.memory_space<vmem>>, vector<2x4xf32>
    tpu.vector_store %arg8[%c0_32, %c0_33], %136 {strides = array<i32>} : memref<2x4xf32, #tpu.memory_space<vmem>>, vector<2x4xf32>,
    return
  }
  func.func @transform_0(%arg0: i32) -> (i32, i32) {
    %c0_i32 = arith.constant 0 : i32
    %c0_i32_0 = arith.constant 0 : i32
    %c0_i32_1 = arith.constant 0 : i32
    return %c0_i32, %c0_i32_0 : i32, i32
  }
  func.func @transform_1(%arg0: i32) -> (i32, i32, i32) {
    %c0_i32 = arith.constant 0 : i32
    %c0_i32_0 = arith.constant 0 : i32
    %c0_i32_1 = arith.constant 0 : i32
    %c0_i32_2 = arith.constant 0 : i32
    return %c0_i32, %c0_i32_0, %c0_i32_1 : i32, i32, i32
  }
  func.func @transform_2(%arg0: i32) -> (i32, i32) {
    %c0_i32 = arith.constant 0 : i32
    %c0_i32_0 = arith.constant 0 : i32
    %c0_i32_1 = arith.constant 0 : i32
    return %c0_i32, %c0_i32_0 : i32, i32
  }
  func.func @transform_3(%arg0: i32) -> (i32, i32) {
    %c0_i32 = arith.constant 0 : i32
    %c0_i32_0 = arith.constant 0 : i32
    %c0_i32_1 = arith.constant 0 : i32
    return %c0_i32, %c0_i32_0 : i32, i32
  }
  func.func @transform_4(%arg0: i32) -> (i32, i32) {
    %c0_i32 = arith.constant 0 : i32
    %c0_i32_0 = arith.constant 0 : i32
    %c0_i32_1 = arith.constant 0 : i32
    return %c0_i32, %c0_i32_0 : i32, i32
  }
  func.func @transform_5(%arg0: i32) -> (i32, i32) {
    %c0_i32 = arith.constant 0 : i32
    %c0_i32_0 = arith.constant 0 : i32
    %c0_i32_1 = arith.constant 0 : i32
    return %c0_i32, %c0_i32_0 : i32, i32
  }
  func.func @transform_6(%arg0: i32) -> (i32, i32) {
    %c0_i32 = arith.constant 0 : i32
    %c0_i32_0 = arith.constant 0 : i32
    %c0_i32_1 = arith.constant 0 : i32
    return %c0_i32, %c0_i32_0 : i32, i32
  }
  func.func @transform_7(%arg0: i32) -> (i32, i32) {
    %c0_i32 = arith.constant 0 : i32
    %c0_i32_0 = arith.constant 0 : i32
    %c0_i32_1 = arith.constant 0 : i32
    return %c0_i32, %c0_i32_0 : i32, i32
  }
}

</mosaic_0001>

<llo_original>
// kernel: find_module.1
$region0: #{find_module.1}
  #allocation0 [shape = 'u32[]', space=smem, size = 0x4, offset = 0x4, fixed_abs, tag = 'smem constant byte address 0x4 - core index']
  #allocation1 [shape = 'u32[144,128]{1,0:T(1,128)}', space=vmem, size = 0x12000, scoped, tag = 'internal scratch']
  %s0 = inlined_call_operand.vmem [shape: f32[2,32], index: 0, kind: input, shape index: {}]
  %s1 = inlined_call_operand.vmem [shape: f32[2,16,32], index: 1, kind: input, shape index: {}]
  %s2 = inlined_call_operand.vmem [shape: f32[2,128], index: 2, kind: input, shape index: {}, may-alias: {2,6}]
  %s3 = inlined_call_operand.vmem [shape: f32[2,4], index: 3, kind: input, shape index: {}]
  %s4 = inlined_call_operand.vmem [shape: f32[32,32], index: 4, kind: input, shape index: {}]
  %s5 = inlined_call_operand.vmem [shape: f32[3,32], index: 5, kind: input, shape index: {}]
  %s6 = inlined_call_operand.vmem [shape: f32[2,128], index: 6, kind: output, shape index: {0}, may-alias: {2,6}]
  %s7 = inlined_call_operand.hbm [shape: f32[2,4], index: 7, kind: output, shape index: {1}]
  %8 = xla_tuple %s6, %s7
  %s9 = sld [smem:[#allocation0]]
  $region42: #{find_module.1} parent=0
    _
  %s11 = ssub.s32 1, %s9
  %s12 = scalar_select 0, %s11, %s9
  $region1: #{find_module.1} parent=0
    #allocation2 [shape = 'u8[1024]{0}', space=vmem, size = 0x400, scoped, tag = 'output window, operand 1, single buffered']
    #allocation3 [shape = 's32[1]{0}', space=sflag, size = 0x4, scoped, tag = 'scoped memory for find_module.1']
    %13 = vsyncpa [#allocation3], 0
    // Predicated region
    $region2: #{find_module.1} parent=1 // pred_check
      _
    $region3: #{find_module.1} parent=1 // pred_check_branch
      %15 = sbr.rel (0) target = $region5
    $region4: #{find_module.1} parent=1 // pred_region
      _
    $region5: #{find_module.1} parent=1 // pred_fallthru
      _
    // Predicated region
    $region6: #{find_module.1} parent=1 // pred_check
      _
    $region7: #{find_module.1} parent=1 // pred_check_branch
      %17 = sbr.rel (0) target = $region9
    $region8: #{find_module.1} parent=1 // pred_region
      _
    $region9: #{find_module.1} parent=1 // pred_fallthru
      _
    // Predicated region
    $region10: #{find_module.1} parent=1 // pred_check
      _
    $region11: #{find_module.1} parent=1 // pred_check_branch
      %19 = sbr.rel (0) target = $region13
    $region12: #{find_module.1} parent=1 // pred_region
      _
    $region13: #{find_module.1} parent=1 // pred_fallthru
      _
    // Predicated region
    $region14: #{find_module.1} parent=1 // pred_check
      _
    $region15: #{find_module.1} parent=1 // pred_check_branch
      %21 = sbr.rel (0) target = $region17
    $region16: #{find_module.1} parent=1 // pred_region
      _
    $region17: #{find_module.1} parent=1 // pred_fallthru
      _
    // Predicated region
    $region18: #{find_module.1} parent=1 // pred_check
      _
    $region19: #{find_module.1} parent=1 // pred_check_branch
      %23 = sbr.rel (0) target = $region21
    $region20: #{find_module.1} parent=1 // pred_region
      _
    $region21: #{find_module.1} parent=1 // pred_fallthru
      _
    // Predicated region
    $region22: #{find_module.1} parent=1 // pred_check
      _
    $region23: #{find_module.1} parent=1 // pred_check_branch
      %25 = sbr.rel (0) target = $region25
    $region24: #{find_module.1} parent=1 // pred_region
      _
    $region25: #{find_module.1} parent=1 // pred_fallthru
      _
    %v26 = vld [vmem:[%s5] sm:$0x7]
    %v27 = vld [vmem:[%s0] sm:$0x3]
    %v28 = vld [vmem:[%s4] sm:$0xff]
    %v29 = vld [vmem:[%s4 + $0x8] sm:$0xff]
    %v30 = vld [vmem:[%s4 + $0x10] sm:$0xff]
    %v31 = vld [vmem:[%s4 + $0x18] sm:$0xff]
    %v32 = vlaneseq
    %v33 = vshrl.u32 %v32, 7
    %v34 = vsub.s32 0, %v33
    %v35 = vrot.slane %v26, %v34
    %vm36 = vcmask 261120
    %v38 = vsel %vm36, %v27, 0
    %40 = vmatprep.subr.mxu0 0.0
    %41 = vmatpush1.msra.mxu0 %v28
    %42 = vmatprep.subr.mxu0 0.0
    %43 = vmatpush1.msra.mxu0 %v29
    %44 = vmatprep.subr.mxu0 0.0
    %45 = vmatpush1.msra.mxu0 %v30
    %46 = vmatprep.subr.mxu0 0.0
    %47 = vmatpush1.msra.mxu0 %v31
    %48 = vmatprep.subr.mxu0 0.0
    %49 = vmatpush1.msra.mxu0 0.0
    %50 = vmatprep.subr.mxu0 0.0
    %51 = vmatpush1.msra.mxu0 0.0
    %52 = vmatprep.subr.mxu0 0.0
    %53 = vmatpush1.msra.mxu0 0.0
    %54 = vmatprep.subr.mxu0 0.0
    %55 = vmatpush1.msra.mxu0 0.0
    %56 = vmatprep.subr.mxu0 0.0
    %57 = vmatpush1.msra.mxu0 0.0
    %58 = vmatprep.subr.mxu0 0.0
    %59 = vmatpush1.msra.mxu0 0.0
    %60 = vmatprep.subr.mxu0 0.0
    %61 = vmatpush1.msra.mxu0 0.0
    %62 = vmatprep.subr.mxu0 0.0
    %63 = vmatpush1.msra.mxu0 0.0
    %64 = vmatprep.subr.mxu0 0.0
    %65 = vmatpush1.msra.mxu0 0.0
    %66 = vmatprep.subr.mxu0 0.0
    %67 = vmatpush1.msra.mxu0 0.0
    %68 = vmatprep.subr.mxu0 0.0
    %69 = vmatpush1.msra.mxu0 0.0
    %70 = vmatprep.subr.mxu0 0.0
    %71 = vmatpush1.msra.mxu0 0.0
    %72 = vmatprep.subr.mxu0 0.0
    %73 = vmatpush1.msra.mxu0 0.0
    %74 = vmatprep.subr.mxu0 0.0
    %75 = vmatpush1.msra.mxu0 0.0
    %76 = vmatprep.subr.mxu0 0.0
    %77 = vmatpush1.msra.mxu0 0.0
    %78 = vmatprep.subr.mxu0 0.0
    %79 = vmatpush1.msra.mxu0 0.0
    %80 = vmatprep.subr.mxu0 0.0
    %81 = vmatpush1.msra.mxu0 0.0
    %82 = vmatprep.subr.mxu0 0.0
    %83 = vmatpush1.msra.mxu0 0.0
    %84 = vmatprep.subr.mxu0 0.0
    %85 = vmatpush1.msra.mxu0 0.0
    %86 = vmatprep.subr.mxu0 0.0
    %87 = vmatpush1.msra.mxu0 0.0
    %88 = vmatprep.subr.mxu0 0.0
    %89 = vmatpush1.msra.mxu0 0.0
    %90 = vmatprep.subr.mxu0 0.0
    %91 = vmatpush1.msra.mxu0 0.0
    %92 = vmatprep.subr.mxu0 0.0
    %93 = vmatpush1.msra.mxu0 0.0
    %94 = vmatprep.subr.mxu0 0.0
    %95 = vmatpush1.msra.mxu0 0.0
    %96 = vmatprep.subr.mxu0 0.0
    %97 = vmatpush1.msra.mxu0 0.0
    %98 = vmatprep.subr.mxu0 0.0
    %99 = vmatpush1.msra.mxu0 0.0
    %100 = vmatprep.subr.mxu0 0.0
    %101 = vmatpush1.msra.mxu0 0.0
    %102 = vmatprep.subr.mxu0 0.0
    %103 = vmatpush1.msra.mxu0 0.0
    %104 = vmatprep.mubr.f32.mxu0 0.0
    %105 = vmatmul.mubr.f32.gmra.mrb[0].mxu0 %v38
    %v106 = vpop.f32.mrb[0].mxu0
    %v107 = vadd.f32 %v35, %v106
    %v108 = vpop.f32.mrb[0].mxu0
    %109 = vdwg.mxu0
    %v110 = vld [vmem:[%s1] sm:$0xff]
    %v111 = vld [vmem:[%s1 + $0x8] sm:$0xff]
    %v112 = vld [vmem:[%s1 + $0x10] sm:$0xff]
    %v113 = vld [vmem:[%s1 + $0x18] sm:$0xff]
    %v116 = vunpack.c.l.s4 1966171168
    %v117 = vunpack.c.0.s8 %v116
    %v118 = vlaneseq
    %v119 = vshrl.u32 %v118, 7
    %v120 = vsub.s32 %v117, %v119
    %v121 = vrot.slane %v107, %v120
    %v122 = vcombine.high %v121, %v121
    %v124 = vunpack.c.l.s4 1966171168
    %v125 = vunpack.c.0.s8 %v124
    %v126 = vlaneseq
    %v127 = vshrl.u32 %v126, 7
    %v128 = vsub.s32 %v125, %v127
    %v129 = vrot.slane %v121, %v128
    %v131 = vunpack.c.l.s4 1966171168
    %v132 = vunpack.c.0.s8 %v131
    %v133 = vlaneseq
    %v134 = vshrl.u32 %v133, 7
    %v135 = vsub.s32 %v132, %v134
    %v136 = vrot.slane %v122, %v135
    %v137 = vlaneseq
    %v138 = vshrl.u32 %v137, 7
    %v139 = vsub.s32 0, %v138
    %v140 = vrot.slane %v129, %v139
    %v141 = vlaneseq
    %v142 = vshrl.u32 %v141, 7
    %v143 = vsub.s32 0, %v142
    %v144 = vrot.slane %v136, %v143
    %v147 = vsub.f32 %v110, %v140
    %v148 = vsub.f32 %v111, %v140
    %v149 = vsub.f32 %v112, %v144
    %v150 = vsub.f32 %v113, %v144
    %v151 = vmul.f32 %v147, %v147
    %v152 = vmul.f32 %v148, %v148
    %v153 = vmul.f32 %v149, %v149
    %v154 = vmul.f32 %v150, %v150
    %v155 = vsub.f32 0.0, %v151
    %v156 = vsub.f32 0.0, %v152
    %v157 = vsub.f32 0.0, %v153
    %v158 = vsub.f32 0.0, %v154
    %v159 = vadd.f32 %v110, %v140
    %v160 = vadd.f32 %v111, %v140
    %v161 = vadd.f32 %v112, %v144
    %v162 = vadd.f32 %v113, %v144
    %v163 = vmax.f32 %v159, 0.0
    %v164 = vmax.f32 %v160, 0.0
    %v165 = vmax.f32 %v161, 0.0
    %v166 = vmax.f32 %v162, 0.0
    %v167 = vadd.f32 %v155, %v163
    %v168 = vadd.f32 %v156, %v164
    %v169 = vadd.f32 %v157, %v165
    %v170 = vadd.f32 %v158, %v166
    %v171 = vlaneseq
    %v172 = vshrl.u32 %v171, 7
    %v173 = vadd.s32 %v172, 8
    %v174 = vlaneseq
    %v175 = vand.u32 %v174, 127
    %v176 = vand.u32 %v175, 3
    %v177 = vlaneseq
    %v178 = vshrl.u32 %v177, 7
    %v179 = vsub.s32 1, %v178
    %v180 = vrot.slane %v26, %v179
    %v181 = vmul.f32 %v167, %v180
    %v182 = vmul.f32 %v168, %v180
    %v183 = vmul.f32 %v169, %v180
    %v184 = vmul.f32 %v170, %v180
    %v185 = vsel %vm36, %v181, 0.0
    %186 = vadd.xlane.f32.xlu0 %v185
    %v187 = vpop.xlane.xlu0 %186
    %v188 = vsel %vm36, %v182, 0.0
    %189 = vadd.xlane.f32.xlu0 %v188
    %v190 = vpop.xlane.xlu0 %189
    %v191 = vsel %vm36, %v183, 0.0
    %192 = vadd.xlane.f32.xlu0 %v191
    %v193 = vpop.xlane.xlu0 %192
    %v194 = vsel %vm36, %v184, 0.0
    %195 = vadd.xlane.f32.xlu0 %v194
    %v196 = vpop.xlane.xlu0 %195
    %v197 = vmax.f32 %v187, %v190
    %v198 = vrot.slane %v197, 4
    %v199 = vmax.f32 %v197, %v198
    %v200 = vrot.slane %v199, 2
    %v201 = vmax.f32 %v199, %v200
    %v202 = vrot.slane %v201, 1
    %v203 = vmax.f32 %v201, %v202
    %v204 = vmax.f32 %v193, %v196
    %v205 = vrot.slane %v204, 4
    %v206 = vmax.f32 %v204, %v205
    %v207 = vrot.slane %v206, 2
    %v208 = vmax.f32 %v206, %v207
    %v209 = vrot.slane %v208, 1
    %v210 = vmax.f32 %v208, %v209
    %v211 = vsub.f32 %v187, %v203
    %v212 = vsub.f32 %v190, %v203
    %v213 = vsub.f32 %v193, %v210
    %v214 = vsub.f32 %v196, %v210
    %v215 = vmul.f32 %v211, 1.442695
    %v216 = vpow.pop %v215
    %v217 = vmul.f32 %v212, 1.442695
    %v218 = vpow.pop %v217
    %v219 = vmul.f32 %v213, 1.442695
    %v220 = vpow.pop %v219
    %v221 = vmul.f32 %v214, 1.442695
    %v222 = vpow.pop %v221
    %v223 = vadd.f32 %v216, %v218
    %v224 = vrot.slane %v223, 4
    %v225 = vadd.f32 %v223, %v224
    %v226 = vrot.slane %v225, 2
    %v227 = vadd.f32 %v225, %v226
    %v228 = vrot.slane %v227, 1
    %v229 = vadd.f32 %v227, %v228
    %v230 = vadd.f32 %v220, %v222
    %v231 = vrot.slane %v230, 4
    %v232 = vadd.f32 %v230, %v231
    %v233 = vrot.slane %v232, 2
    %v234 = vadd.f32 %v232, %v233
    %v235 = vrot.slane %v234, 1
    %v236 = vadd.f32 %v234, %v235
    %v237 = vrcp.pop %v229
    %v238 = vrcp.pop %v236
    %v239 = vmul.f32 %v216, %v237
    %v240 = vmul.f32 %v218, %v237
    %v241 = vmul.f32 %v220, %v238
    %v242 = vmul.f32 %v222, %v238
    %v243 = vmul.u32 %v172, 8
    %v244 = vmul.u32 %v173, 8
    %vm245 = vcmp.ge.s32.totalorder %v175, %v243
    %vm246 = vcmp.ge.s32.totalorder %v175, %v244
    %v247 = vadd.s32 %v243, 4
    %v248 = vadd.s32 %v244, 4
    %vm249 = vcmp.lt.s32.totalorder %v175, %v247
    %vm250 = vcmp.lt.s32.totalorder %v175, %v248
    %vm251 = vmand %vm245, %vm249
    %vm252 = vmand %vm246, %vm250
    %v253 = vsel %vm251, 1, 0
    %v254 = vsel %vm252, 1, 0
    %v255 = vcvt.s32.f32 %v253
    %v256 = vcvt.s32.f32 %v254
    %v257 = vmul.f32 %v239, %v255
    %v258 = vmul.f32 %v240, %v256
    %v259 = vmul.f32 %v241, %v255
    %v260 = vmul.f32 %v242, %v256
    %v261 = vadd.f32 %v257, %v258
    %v262 = vrot.slane %v261, 4
    %v263 = vadd.f32 %v261, %v262
    %v264 = vrot.slane %v263, 2
    %v265 = vadd.f32 %v263, %v264
    %v266 = vrot.slane %v265, 1
    %v267 = vadd.f32 %v265, %v266
    %v268 = vadd.f32 %v259, %v260
    %v269 = vrot.slane %v268, 4
    %v270 = vadd.f32 %v268, %v269
    %v271 = vrot.slane %v270, 2
    %v272 = vadd.f32 %v270, %v271
    %v273 = vrot.slane %v272, 1
    %v274 = vadd.f32 %v272, %v273
    %v275 = vadd.f32 %v267, 0.0
    %v276 = vadd.f32 %v274, 0.0
    %v277 = vlaneseq
    %v278 = vshrl.u32 %v277, 7
    %v279 = vsub.s32 2, %v278
    %v280 = vrot.slane %v26, %v279
    %v281 = vmul.f32 %v167, %v280
    %v282 = vmul.f32 %v168, %v280
    %v283 = vmul.f32 %v169, %v280
    %v284 = vmul.f32 %v170, %v280
    %v285 = vsel %vm36, %v281, 0.0
    %286 = vadd.xlane.f32.xlu0 %v285
    %v287 = vpop.xlane.xlu0 %286
    %v288 = vsel %vm36, %v282, 0.0
    %289 = vadd.xlane.f32.xlu0 %v288
    %v290 = vpop.xlane.xlu0 %289
    %v291 = vsel %vm36, %v283, 0.0
    %292 = vadd.xlane.f32.xlu0 %v291
    %v293 = vpop.xlane.xlu0 %292
    %v294 = vsel %vm36, %v284, 0.0
    %295 = vadd.xlane.f32.xlu0 %v294
    %v296 = vpop.xlane.xlu0 %295
    %v297 = vmax.f32 %v287, %v290
    %v298 = vrot.slane %v297, 4
    %v299 = vmax.f32 %v297, %v298
    %v300 = vrot.slane %v299, 2
    %v301 = vmax.f32 %v299, %v300
    %v302 = vrot.slane %v301, 1
    %v303 = vmax.f32 %v301, %v302
    %v304 = vmax.f32 %v293, %v296
    %v305 = vrot.slane %v304, 4
    %v306 = vmax.f32 %v304, %v305
    %v307 = vrot.slane %v306, 2
    %v308 = vmax.f32 %v306, %v307
    %v309 = vrot.slane %v308, 1
    %v310 = vmax.f32 %v308, %v309
    %v311 = vsub.f32 %v287, %v303
    %v312 = vsub.f32 %v290, %v303
    %v313 = vsub.f32 %v293, %v310
    %v314 = vsub.f32 %v296, %v310
    %v315 = vmul.f32 %v311, 1.442695
    %v316 = vpow.pop %v315
    %v317 = vmul.f32 %v312, 1.442695
    %v318 = vpow.pop %v317
    %v319 = vmul.f32 %v313, 1.442695
    %v320 = vpow.pop %v319
    %v321 = vmul.f32 %v314, 1.442695
    %v322 = vpow.pop %v321
    %v323 = vadd.f32 %v316, %v318
    %v324 = vrot.slane %v323, 4
    %v325 = vadd.f32 %v323, %v324
    %v326 = vrot.slane %v325, 2
    %v327 = vadd.f32 %v325, %v326
    %v328 = vrot.slane %v327, 1
    %v329 = vadd.f32 %v327, %v328
    %v330 = vadd.f32 %v320, %v322
    %v331 = vrot.slane %v330, 4
    %v332 = vadd.f32 %v330, %v331
    %v333 = vrot.slane %v332, 2
    %v334 = vadd.f32 %v332, %v333
    %v335 = vrot.slane %v334, 1
    %v336 = vadd.f32 %v334, %v335
    %v337 = vrcp.pop %v329
    %v338 = vrcp.pop %v336
    %v339 = vmul.f32 %v316, %v337
    %v340 = vmul.f32 %v318, %v337
    %v341 = vmul.f32 %v320, %v338
    %v342 = vmul.f32 %v322, %v338
    %vm343 = vcmp.ge.s32.totalorder %v175, %v247
    %vm344 = vcmp.ge.s32.totalorder %v175, %v248
    %v345 = vadd.s32 %v247, 4
    %v346 = vadd.s32 %v248, 4
    %vm347 = vcmp.lt.s32.totalorder %v175, %v345
    %vm348 = vcmp.lt.s32.totalorder %v175, %v346
    %vm349 = vmand %vm343, %vm347
    %vm350 = vmand %vm344, %vm348
    %v351 = vsel %vm349, 1, 0
    %v352 = vsel %vm350, 1, 0
    %v353 = vcvt.s32.f32 %v351
    %v354 = vcvt.s32.f32 %v352
    %v355 = vmul.f32 %v339, %v353
    %v356 = vmul.f32 %v340, %v354
    %v357 = vmul.f32 %v341, %v353
    %v358 = vmul.f32 %v342, %v354
    %v359 = vadd.f32 %v355, %v356
    %v360 = vrot.slane %v359, 4
    %v361 = vadd.f32 %v359, %v360
    %v362 = vrot.slane %v361, 2
    %v363 = vadd.f32 %v361, %v362
    %v364 = vrot.slane %v363, 1
    %v365 = vadd.f32 %v363, %v364
    %v366 = vadd.f32 %v357, %v358
    %v367 = vrot.slane %v366, 4
    %v368 = vadd.f32 %v366, %v367
    %v369 = vrot.slane %v368, 2
    %v370 = vadd.f32 %v368, %v369
    %v371 = vrot.slane %v370, 1
    %v372 = vadd.f32 %v370, %v371
    %v373 = vadd.f32 %v275, %v365
    %v374 = vadd.f32 %v276, %v372
    %v375 = vld [vmem:[%s3] sm:$0x3]
    %vm376 = vcmp.eq.s32.totalorder %v176, 1
    %v377 = vsel %vm376, 1, 0
    %v378 = vcvt.s32.f32 %v377
    %380 = vset.pattern.permute.xlu0 0
    %381 = vperm.xlu0 %380, %v375
    %v382 = vpop.permute.xlu0 %381
    %v384 = vmul.f32 %v382, %v378
    %v385 = vadd.f32 %v384, 0.0
    %vm386 = vcmp.eq.s32.totalorder %v176, 2
    %v387 = vsel %vm386, 1, 0
    %v388 = vcvt.s32.f32 %v387
    %389 = vset.pattern.permute.xlu0 1
    %390 = vperm.xlu0 %389, %v375
    %v391 = vpop.permute.xlu0 %390
    %v393 = vmul.f32 %v391, %v388
    %v394 = vadd.f32 %v385, %v393
    %vm395 = vcmp.eq.s32.totalorder %v176, 3
    %v396 = vsel %vm395, 1, 0
    %v397 = vcvt.s32.f32 %v396
    %398 = vset.pattern.permute.xlu0 2
    %399 = vperm.xlu0 %398, %v375
    %v400 = vpop.permute.xlu0 %399
    %v402 = vmul.f32 %v400, %v397
    %v403 = vadd.f32 %v394, %v402
    %404 = vset.pattern.permute.xlu0 3
    %405 = vperm.xlu0 %404, %v375
    %v406 = vpop.permute.xlu0 %405
    %v408 = vmul.f32 %v406, %v397
    %v409 = vadd.f32 %v403, %v408
    %v411 = vrot.slane %v409, 1
    %v414 = vmul.f32 %v373, %v409
    %v415 = vmul.f32 %v374, %v411
    %v416 = vld [vmem:[%s2] sm:$0x3]
    %v417 = vsub.f32 1.0, %v409
    %v418 = vmul.f32 %v416, %v417
    %v420 = vrot.slane %v418, 1
    %v423 = vadd.f32 %v414, %v418
    %v424 = vadd.f32 %v415, %v420
    %v427 = vrot.slane %v424, 7
    %vm428 = vcmask 1041409
    %v429 = vsel %vm428, %v427, %v423
    %431 = vst [vmem:[%s6] sm:$0x3] %v429
    %vm432 = vcmask 25600
    %433 = vst.msk [vmem:[#allocation2] sm:$0x3] %vm432, %v409
    // Predicated region
    $region26: #{find_module.1} parent=1 // pred_check
      _
    $region27: #{find_module.1} parent=1 // pred_check_branch
      %435 = sbr.rel (0) target = $region29
    $region28: #{find_module.1} parent=1 // pred_region
      _
    $region29: #{find_module.1} parent=1 // pred_fallthru
      _
    // Predicated region
    $region30: #{find_module.1} parent=1 // pred_check
      _
    $region31: #{find_module.1} parent=1 // pred_check_branch
      %437 = sbr.rel (0) target = $region33
    $region32: #{find_module.1} parent=1 // pred_region
      %s439 = ssub.s32 32, 32
      %440 = vsyncadd [#allocation3], %s439
      %s442 = sshll.u32 [#allocation2], 4
      %s443 = int_to_ptr.vmem [resolvable:$true] %s442
      %445 = dma.vmem_to_hbm [thread:$0]  %s443, 32, %s7, [#allocation3]
    $region33: #{find_module.1} parent=1 // pred_fallthru
      _
    // Predicated region
    $region34: #{find_module.1} parent=1 // pred_check
      _
    $region35: #{find_module.1} parent=1 // pred_check_branch
      %447 = sbr.rel (0) target = $region37
    $region36: #{find_module.1} parent=1 // pred_region
      _
    $region37: #{find_module.1} parent=1 // pred_fallthru
      _
    // Predicated region
    $region38: #{find_module.1} parent=1 // pred_check
      _
    $region39: #{find_module.1} parent=1 // pred_check_branch
      %449 = sbr.rel (0) target = $region41
    $region40: #{find_module.1} parent=1 // pred_region
      %450 = dma.done [#allocation3], 32
    $region41: #{find_module.1} parent=1 // pred_fallthru
      _
    %451 = vsyncpa [#allocation3], 1

</llo_original>
